<compile_context>
chip_gen: v5e
topology: v5e:2x2
jax: 0.10.0
libtpu: 0.0.40
codegen_flags: <defaults>
</compile_context>

<pallas_src>
import jax
import jax.numpy as jnp
from jax.experimental import pallas as pl
from jax.experimental.pallas import tpu as pltpu

_MIB = 1024 * 1024


def _vmem_plan():
    """Per-generation VMEM budgeting.

    Returns (live_budget_bytes, vmem_limit_bytes).  live_budget bounds the
    double-buffered working set (input tile + both output tiles, 2-deep);
    vmem_limit is handed to the compiler and stays well under physical VMEM
    (64 MiB on v7x, 128 MiB on v5e/v6e).
    """
    cap = 64 * _MIB  # assume the most VMEM-constrained generation (v7x)
    try:
        c = int(getattr(pltpu.get_tpu_info(), "vmem_capacity_bytes", 0) or 0)
        if 32 * _MIB <= c <= 128 * _MIB:
            cap = c
    except Exception:
        pass
    live_budget = cap // 4                           # 16 MiB (v7x) / 32 MiB (v5e,v6e)
    vmem_limit = min(3 * cap // 4, cap - 16 * _MIB)  # 48 MiB (v7x) / 96 MiB (v5e,v6e)
    return live_budget, max(vmem_limit, live_budget + 8 * _MIB)


def _sublane_multiple(itemsize):
    # f32/s32 -> 8, bf16/f16 -> 16, int8/fp8 -> 32 (sub-32-bit packs along sublanes).
    return max(8, 32 // max(1, itemsize))


def _round_up(x, m):
    return ((x + m - 1) // m) * m


# ----------------------------------------------------------------------------
# Even-length path: batch folded into the row axis, 1-D grid.
# ----------------------------------------------------------------------------
def _split_kernel(x_ref, even_ref, odd_ref):
    # x_ref: (r_tile, 2*D) reshaped rows; even rows of the original sequence in
    # lanes [0:D], odd rows in lanes [D:2D].  With D % 128 == 0 both slices are
    # whole-vreg, lane-aligned copies (no XLU rotate, no masked stores).
    d = even_ref.shape[-1]
    even_ref[...] = x_ref[:, :d]
    odd_ref[...] = x_ref[:, d:]


def _split_even_length(x):
    """x: (B, T2, D), T2 even, D % 128 == 0  ->  (even, odd), each (B, T2//2, D)."""
    B, T2, D = x.shape
    t_half = T2 // 2
    itemsize = jnp.dtype(x.dtype).itemsize
    sub = _sublane_multiple(itemsize)
    live_budget, vmem_limit = _vmem_plan()

    # Free, contiguous reshapes: fold batch into the row axis so tiles stay
    # large and uniform regardless of how B and T trade off.
    rows = B * t_half
    xr = x.reshape(rows, 2 * D)
    total_bytes = rows * 2 * D * itemsize

    # Largest row tile keeping the 2-deep pipelined working set under budget:
    #   live bytes ~= 2 * (r*2D + r*D + r*D) * itemsize = 8 * r * D * itemsize
    r_tile = live_budget // (8 * D * itemsize)
    r_tile = max(sub, (r_tile // sub) * sub)
    if r_tile >= rows:
        if total_bytes >= 2 * _MIB:
            # Keep >= 2 grid steps so the v7x megacore can shard this
            # bandwidth-bound copy across both TensorCores.
            half = _round_up(pl.cdiv(rows, 2), sub)
            r_tile = half if half < rows else rows
        else:
            r_tile = rows  # tiny problem: single full-array block, minimal overhead

    grid = (pl.cdiv(rows, r_tile),)

    even, odd = pl.pallas_call(
        _split_kernel,
        out_shape=(
            jax.ShapeDtypeStruct((rows, D), x.dtype),
            jax.ShapeDtypeStruct((rows, D), x.dtype),
        ),
        grid_spec=pltpu.PrefetchScalarGridSpec(
            num_scalar_prefetch=0,
            grid=grid,
            in_specs=[pl.BlockSpec((r_tile, 2 * D), lambda r: (r, 0))],
            out_specs=[
                pl.BlockSpec((r_tile, D), lambda r: (r, 0)),
                pl.BlockSpec((r_tile, D), lambda r: (r, 0)),
            ],
        ),
        compiler_params=pltpu.CompilerParams(
            dimension_semantics=("parallel",),
            vmem_limit_bytes=vmem_limit,
        ),
        cost_estimate=pl.CostEstimate(
            flops=0, transcendentals=0, bytes_accessed=2 * total_bytes),
    )(xr)
    return even.reshape(B, t_half, D), odd.reshape(B, t_half, D)


# ----------------------------------------------------------------------------
# Odd-length path: tail row written inside the kernel (no HBM concat of even).
# ----------------------------------------------------------------------------
def _make_split_tail_kernel(tail_local):
    def kernel(x_ref, tail_ref, even_ref, odd_ref):
        # x_ref:    (1, r_tile, 2*D)   body rows (lane-slice layout)
        # tail_ref: (1, 1, D)          final even-indexed row of x
        # even_ref: (1, r_tile, D)     block of a (B, t_half+1, D) output
        # odd_ref:  (1, r_tile, D)     block of a (B, t_half,   D) output
        d = even_ref.shape[-1]
        even_ref[...] = x_ref[:, :, :d]
        odd_ref[...] = x_ref[:, :, d:]

        @pl.when(pl.program_id(1) == pl.num_programs(1) - 1)
        def _():
            # Overwrite the final even row (original row T-1) with the tail.
            even_ref[0, tail_local:tail_local + 1, :] = tail_ref[0, :, :]

    return kernel


def _split_odd_length(x):
    """x: (B, T, D), T odd >= 3, D % 128 == 0 -> (even (B,(T+1)//2,D), odd (B,T//2,D))."""
    B, T, D = x.shape
    t_half = T // 2          # number of odd rows == number of body even rows
    t_even = t_half + 1
    itemsize = jnp.dtype(x.dtype).itemsize
    sub = _sublane_multiple(itemsize)
    live_budget, vmem_limit = _vmem_plan()

    # Body rows (even-length prefix) reshaped so even/odd become lane slices.
    xr = x[:, : 2 * t_half, :].reshape(B, t_half, 2 * D)
    tail = x[:, T - 1:T, :]                          # (B, 1, D): final even row

    # Row tile: multiple of the sublane packing AND not dividing t_half, so the
    # last row block always covers row index t_half of the even output, where
    # the tail row is written in-kernel.
    r0 = live_budget // (8 * D * itemsize)
    r0 = max(sub, (r0 // sub) * sub)
    r0 = min(r0, _round_up(t_even, sub))             # no point tiling beyond the array
    r0 = max(r0, sub)

    r_tile = None
    r = r0
    while r >= sub:
        if t_half % r != 0:
            r_tile = r
            break
        r -= sub
    if r_tile is None:
        r_cover = _round_up(t_even, sub)             # one block covering everything
        if 8 * r_cover * D * itemsize <= 2 * live_budget:
            r_tile = r_cover
    if r_tile is None:
        # Degenerate tiling (huge D with tiny, highly divisible t_half): fall
        # back to the body kernel plus a small concat for the final row.
        even_body, odd = _split_even_length(x[:, : 2 * t_half, :])
        return jnp.concatenate([even_body, tail], axis=1), odd

    nrb = pl.cdiv(t_half, r_tile)
    assert nrb * r_tile > t_half                     # tail row is inside the last block
    tail_local = t_half - (nrb - 1) * r_tile

    even, odd = pl.pallas_call(
        _make_split_tail_kernel(tail_local),
        out_shape=(
            jax.ShapeDtypeStruct((B, t_even, D), x.dtype),
            jax.ShapeDtypeStruct((B, t_half, D), x.dtype),
        ),
        grid_spec=pltpu.PrefetchScalarGridSpec(
            num_scalar_prefetch=0,
            grid=(B, nrb),
            in_specs=[
                pl.BlockSpec((1, r_tile, 2 * D), lambda b, r: (b, r, 0)),
                pl.BlockSpec((1, 1, D), lambda b, r: (b, 0, 0)),
            ],
            out_specs=[
                pl.BlockSpec((1, r_tile, D), lambda b, r: (b, r, 0)),
                pl.BlockSpec((1, r_tile, D), lambda b, r: (b, r, 0)),
            ],
        ),
        compiler_params=pltpu.CompilerParams(
            dimension_semantics=("parallel", "parallel"),
            vmem_limit_bytes=vmem_limit,
        ),
        cost_estimate=pl.CostEstimate(
            flops=0, transcendentals=0, bytes_accessed=2 * B * T * D * itemsize),
    )(xr, tail)
    return even, odd


# ----------------------------------------------------------------------------
# Public entry point (matches Splitting.forward).
# ----------------------------------------------------------------------------
def splitting(x):
    """Pallas equivalent of Splitting.forward: (x[:, ::2, :], x[:, 1::2, :])."""
    B, T, D = x.shape

    if T < 2:
        return x, x[:, 1:1, :]  # nothing to de-interleave

    if B == 0 or D == 0 or D % 128 != 0:
        # Lane-slice kernel would need mid-vreg rotates and masked (<128-lane)
        # stores (~4.5x penalty); XLA's strided slice is the better tool here.
        return x[:, ::2, :], x[:, 1::2, :]

    if T % 2 == 0:
        return _split_even_length(x)
    return _split_odd_length(x)


if __name__ == "__main__":
    key = jax.random.PRNGKey(0)
    k1, k2, k3 = jax.random.split(key, 3)

    def _check(x):
        even_out, odd_out = splitting(x)
        even_out = jax.block_until_ready(even_out)
        odd_out = jax.block_until_ready(odd_out)
        even_ref = x[:, ::2, :]
        odd_ref = x[:, 1::2, :]
        assert even_out.shape == even_ref.shape and odd_out.shape == odd_ref.shape
        assert bool(jnp.array_equal(even_out, even_ref))
        assert bool(jnp.array_equal(odd_out, odd_ref))

    # Primary: lane-aligned Pallas fast path (D multiple of 128), even seq length.
    _check(jax.random.normal(k1, (2, 8, 128), dtype=jnp.float32))
    # Odd sequence length: tail row written inside the kernel (no HBM concat).
    _check(jax.random.normal(k2, (2, 9, 128), dtype=jnp.float32))
    # D not a multiple of 128: dispatches to XLA strided slice (per perf review).
    _check(jax.random.normal(k3, (2, 8, 32), dtype=jnp.float32))

    print("KERNEL_OK")
</pallas_src>

<mosaic_0001>
module attributes {stable_mosaic.version = 11 : i64} {
  func.func @_split_kernel(%arg0: i32, %arg1: memref<8x256xf32, #tpu.memory_space<vmem>>, %arg2: memref<8x128xf32, #tpu.memory_space<vmem>>, %arg3: memref<8x128xf32, #tpu.memory_space<vmem>>) attributes {dimension_semantics = [#tpu.dimension_semantics<parallel>], iteration_bounds = array<i64: 1>, scalar_prefetch = 0 : i64, scratch_operands = 0 : i64, tpu.core_type = #tpu.core_type<tc>, window_params = [{transform_indices = @transform_0, window_bounds = array<i64: 8, 256>}, {transform_indices = @transform_1, window_bounds = array<i64: 8, 128>}, {transform_indices = @transform_2, window_bounds = array<i64: 8, 128>}]} {
    %c0 = arith.constant 0 : index
    %c0_0 = arith.constant 0 : index
    %0 = vector.load %arg1[%c0, %c0_0] : memref<8x256xf32, #tpu.memory_space<vmem>>, vector<8x128xf32>
    %c0_1 = arith.constant 0 : index
    %c0_2 = arith.constant 0 : index
    %1 = vector.load %arg2[%c0_1, %c0_2] : memref<8x128xf32, #tpu.memory_space<vmem>>, vector<8x128xf32>
    tpu.vector_store %arg2[%c0_1, %c0_2], %0 {strides = array<i32>} : memref<8x128xf32, #tpu.memory_space<vmem>>, vector<8x128xf32>,
    %c0_3 = arith.constant 0 : index
    %c128 = arith.constant 128 : index
    %2 = vector.load %arg1[%c0_3, %c128] : memref<8x256xf32, #tpu.memory_space<vmem>>, vector<8x128xf32>
    %c0_4 = arith.constant 0 : index
    %c0_5 = arith.constant 0 : index
    %3 = vector.load %arg3[%c0_4, %c0_5] : memref<8x128xf32, #tpu.memory_space<vmem>>, vector<8x128xf32>
    tpu.vector_store %arg3[%c0_4, %c0_5], %2 {strides = array<i32>} : memref<8x128xf32, #tpu.memory_space<vmem>>, vector<8x128xf32>,
    return
  }
  func.func @transform_0(%arg0: i32) -> (i32, i32) {
    %c0_i32 = arith.constant 0 : i32
    %c0_i32_0 = arith.constant 0 : i32
    return %arg0, %c0_i32 : i32, i32
  }
  func.func @transform_1(%arg0: i32) -> (i32, i32) {
    %c0_i32 = arith.constant 0 : i32
    %c0_i32_0 = arith.constant 0 : i32
    return %arg0, %c0_i32 : i32, i32
  }
  func.func @transform_2(%arg0: i32) -> (i32, i32) {
    %c0_i32 = arith.constant 0 : i32
    %c0_i32_0 = arith.constant 0 : i32
    return %arg0, %c0_i32 : i32, i32
  }
}

</mosaic_0001>

<llo_original>
// kernel: tpu_custom_call.1
$region0: #{tpu_custom_call.1}
  #allocation0 [shape = 'u32[]', space=smem, size = 0x4, offset = 0x4, fixed_abs, tag = 'smem constant byte address 0x4 - core index']
  #allocation1 [shape = 'u32[72,128]{1,0:T(1,128)}', space=vmem, size = 0x9000, scoped, tag = 'internal scratch']
  %s0 = inlined_call_operand.hbm [shape: f32[8,256], index: 0, kind: input, shape index: {}]
  %s1 = inlined_call_operand.hbm [shape: f32[8,128], index: 1, kind: output, shape index: {0}]
  %s2 = inlined_call_operand.hbm [shape: f32[8,128], index: 2, kind: output, shape index: {1}]
  %3 = xla_tuple %s1, %s2
  %s4 = sld [smem:[#allocation0]]
  $region26: #{tpu_custom_call.1} parent=0
    _
  %s6 = ssub.s32 1, %s4
  %s7 = scalar_select 0, %s6, %s4
  $region1: #{tpu_custom_call.1} parent=0
    #allocation2 [shape = 'u8[8192]{0}', space=vmem, size = 0x2000, scoped, tag = 'input window, operand 0, single buffered']
    #allocation3 [shape = 's32[1]{0}', space=sflag, size = 0x4, scoped, tag = 'scoped memory for tpu_custom_call.1']
    #allocation4 [shape = 's32[1]{0}', space=sflag, size = 0x4, scoped, tag = 'scoped memory for tpu_custom_call.1']
    #allocation5 [shape = 'u8[4096]{0}', space=vmem, size = 0x1000, scoped, tag = 'output window, operand 0, single buffered']
    #allocation6 [shape = 'u8[4096]{0}', space=vmem, size = 0x1000, scoped, tag = 'output window, operand 1, single buffered']
    #allocation7 [shape = 's32[1]{0}', space=sflag, size = 0x4, scoped, tag = 'scoped memory for tpu_custom_call.1']
    %8 = vsyncpa [#allocation3], 0
    %9 = vsyncpa [#allocation4], 0
    %10 = vsyncpa [#allocation7], 0
    // Predicated region
    $region2: #{tpu_custom_call.1} parent=1 // pred_check
      _
    $region3: #{tpu_custom_call.1} parent=1 // pred_check_branch
      %12 = sbr.rel (0) target = $region5
    $region4: #{tpu_custom_call.1} parent=1 // pred_region
      %14 = vsyncadd [#allocation3], 0
      %s16 = sshll.u32 %s0, 4
      %s17 = int_to_ptr.hbm [resolvable:$true] %s16
      %s18 = sshll.u32 [#allocation2], 4
      %s19 = int_to_ptr.vmem [resolvable:$true] %s18
      %21 = dma.hbm_to_vmem [thread:$0]  %s17, 256, %s19, [#allocation3]
    $region5: #{tpu_custom_call.1} parent=1 // pred_fallthru
      _
    // Predicated region
    $region6: #{tpu_custom_call.1} parent=1 // pred_check
      _
    $region7: #{tpu_custom_call.1} parent=1 // pred_check_branch
      %23 = sbr.rel (0) target = $region9
    $region8: #{tpu_custom_call.1} parent=1 // pred_region
      %25 = dma.done [#allocation3], 256
    $region9: #{tpu_custom_call.1} parent=1 // pred_fallthru
      _
    %v26 = vld [vmem:[#allocation2] sm:$0xff]
    %27 = vst [vmem:[#allocation5] sm:$0xff] %v26
    %v28 = vld [vmem:[#allocation2 + $0x8] sm:$0xff]
    %29 = vst [vmem:[#allocation6] sm:$0xff] %v28
    // Predicated region
    $region10: #{tpu_custom_call.1} parent=1 // pred_check
      _
    $region11: #{tpu_custom_call.1} parent=1 // pred_check_branch
      %31 = sbr.rel (0) target = $region13
    $region12: #{tpu_custom_call.1} parent=1 // pred_region
      %33 = vsyncadd [#allocation4], 0
      %s35 = sshll.u32 [#allocation5], 4
      %s36 = int_to_ptr.vmem [resolvable:$true] %s35
      %s37 = sshll.u32 %s1, 4
      %s38 = int_to_ptr.hbm [resolvable:$true] %s37
      %40 = dma.vmem_to_hbm [thread:$0]  %s36, 128, %s38, [#allocation4]
    $region13: #{tpu_custom_call.1} parent=1 // pred_fallthru
      _
    // Predicated region
    $region14: #{tpu_custom_call.1} parent=1 // pred_check
      _
    $region15: #{tpu_custom_call.1} parent=1 // pred_check_branch
      %42 = sbr.rel (0) target = $region17
    $region16: #{tpu_custom_call.1} parent=1 // pred_region
      %44 = vsyncadd [#allocation7], 0
      %s46 = sshll.u32 [#allocation6], 4
      %s47 = int_to_ptr.vmem [resolvable:$true] %s46
      %s48 = sshll.u32 %s2, 4
      %s49 = int_to_ptr.hbm [resolvable:$true] %s48
      %51 = dma.vmem_to_hbm [thread:$0]  %s47, 128, %s49, [#allocation7]
    $region17: #{tpu_custom_call.1} parent=1 // pred_fallthru
      _
    // Predicated region
    $region18: #{tpu_custom_call.1} parent=1 // pred_check
      _
    $region19: #{tpu_custom_call.1} parent=1 // pred_check_branch
      %53 = sbr.rel (0) target = $region21
    $region20: #{tpu_custom_call.1} parent=1 // pred_region
      %55 = dma.done [#allocation4], 128
    $region21: #{tpu_custom_call.1} parent=1 // pred_fallthru
      _
    // Predicated region
    $region22: #{tpu_custom_call.1} parent=1 // pred_check
      _
    $region23: #{tpu_custom_call.1} parent=1 // pred_check_branch
      %57 = sbr.rel (0) target = $region25
    $region24: #{tpu_custom_call.1} parent=1 // pred_region
      %59 = dma.done [#allocation7], 128
    $region25: #{tpu_custom_call.1} parent=1 // pred_fallthru
      _
    %60 = vsyncpa [#allocation3], 1
    %61 = vsyncpa [#allocation4], 1
    %62 = vsyncpa [#allocation7], 1

</llo_original>
